<compile_context>
chip_gen: v7x
topology: tpu7x:2x2x1
jax: 0.10.0
libtpu: 0.0.40
codegen_flags: <defaults>
</compile_context>

<pallas_src>
import functools

import jax
import jax.numpy as jnp
from jax.experimental import pallas as pl
from jax.experimental.pallas import tpu as pltpu


def _vq_kernel(xt_ref, em2_ref, e2_ref, et_ref, qt_ref, counts_ref, *,
               n_total, block_cols, needs_mask):
    # xt_ref:     (D, TN)   f32  tile of x_flat^T (columns = flattened NHWC rows)
    # em2_ref:    (Kp, D)   f32  -2 * padded codebook (VMEM-resident)
    # e2_ref:     (Kp, 1)   f32  ||e||^2 (+1e30 sentinel on padded rows)
    # et_ref:     (D, Kp)   f32  padded codebook, transposed (VMEM-resident)
    # qt_ref:     (D, TN)   f32  quantized tile (transposed -> lane-dense store)
    # counts_ref: (1, Kp)   f32  this step's partial codebook-usage counts
    xt = xt_ref[...]

    # score = ||e||^2 - 2 e.x : same argmin as the full distance, since the
    # per-column ||x||^2 term is constant.  One MXU matmul + broadcast add.
    score = jnp.dot(em2_ref[...], xt,
                    preferred_element_type=jnp.float32) + e2_ref[...]   # (Kp, TN)

    # argmin over the codebook (sublane) axis, first index on ties.
    row = jax.lax.broadcasted_iota(jnp.int32, score.shape, 0)           # (Kp, TN)
    smin = jnp.min(score, axis=0, keepdims=True)                        # (1, TN)
    big = jnp.iinfo(jnp.int32).max
    idx = jnp.min(jnp.where(score <= smin, row, big), axis=0, keepdims=True)
    enc = (row == idx).astype(jnp.float32)                              # one-hot (Kp, TN)

    # quantized^T = codebook^T @ one-hot  -> (D, TN), lane-dense output store.
    qt_ref[...] = jnp.dot(et_ref[...], enc, preferred_element_type=jnp.float32)

    # Per-step partial usage counts (1, Kp) via a tiny matmul.  The ragged-tail
    # mask is folded into the "ones" vector, so the common path is untouched.
    if needs_mask:
        col = (jax.lax.broadcasted_iota(jnp.int32, (1, block_cols), 1)
               + pl.program_id(0) * block_cols)
        ones = (col < n_total).astype(jnp.float32)
    else:
        ones = jnp.ones((1, block_cols), jnp.float32)
    counts_ref[...] = jax.lax.dot_general(
        ones, enc, (((1,), (1,)), ((), ())), preferred_element_type=jnp.float32)


def _round_up(v, m):
    return (v + m - 1) // m * m


def _vmem_budget():
    """Per-generation (tile-selection budget, Mosaic vmem_limit_bytes)."""
    cap = None
    try:
        cap = getattr(pltpu.get_tpu_info(), "vmem_capacity_bytes", None)
    except Exception:
        cap = None
    if cap is None:
        cap = 64 * 1024 * 1024               # conservative: assume v7x-sized VMEM
    if cap <= 64 * 1024 * 1024:              # v7x: leave headroom for Mosaic scratch
        limit = 48 * 1024 * 1024
    else:                                    # v5e / v6e: 128 MiB physical
        limit = 100 * 1024 * 1024
    return int(limit * 3 // 4), limit


def _choose_block_cols(n_cols, k_pad, d, budget):
    """Pick a column tile keeping the working set inside the VMEM budget."""
    d_sub = _round_up(d, 8)                  # x/q tiles: D lives on sublanes
    d_lane = _round_up(d, 128)               # codebook tiles: D padded to lanes

    def usage(t):
        temps = 6 * k_pad * t * 4            # ~6 live (Kp, TN) f32/i32 temporaries
        tiles = 2 * 2 * d_sub * t * 4        # x & q tiles, double-buffered
        code = (k_pad * d_lane + d_sub * k_pad + k_pad * 128 + 2 * 8 * k_pad) * 4
        return temps + tiles + 2 * code      # codebook operands also double-buffered

    tn = 2048
    while tn > 128 and usage(tn) > budget:
        tn //= 2
    while tn > 128 and tn > _round_up(n_cols, 128):
        tn //= 2
    return max(tn, 128)


def vq_pallas(x_t, embeddings):
    """x_t: (D, N) transposed flattened input. Returns (q_t (D, N), counts (K,))."""
    d, n = x_t.shape
    k = embeddings.shape[0]
    k_pad = _round_up(k, 128)                # lane-dense counts / sublane-full score

    # Padded codebook operands, all precomputed once (hoisted out of the kernel).
    e_pad = jnp.zeros((k_pad, d), jnp.float32).at[:k, :].set(
        embeddings.astype(jnp.float32))
    e2 = jnp.sum(e_pad * e_pad, axis=1, keepdims=True)                  # (Kp, 1)
    e2 = jnp.where((jnp.arange(k_pad) < k)[:, None], e2, jnp.float32(1e30))
    em2 = -2.0 * e_pad                                                  # (Kp, D)
    et = jnp.transpose(e_pad)                                           # (D, Kp)

    budget, vmem_limit = _vmem_budget()
    tn = _choose_block_cols(n, k_pad, d, budget)
    n_pad = _round_up(n, tn)
    nt = n_pad // tn
    if n_pad != n:
        x_t = jnp.pad(x_t, ((0, 0), (0, n_pad - n)))

    kernel = functools.partial(_vq_kernel, n_total=n, block_cols=tn,
                               needs_mask=(n_pad != n))

    q_t, counts = pl.pallas_call(
        kernel,
        grid=(nt,),
        in_specs=[
            pl.BlockSpec((d, tn), lambda i: (0, i)),       # x^T tile (pipelined)
            pl.BlockSpec((k_pad, d), lambda i: (0, 0)),    # -2*codebook, resident
            pl.BlockSpec((k_pad, 1), lambda i: (0, 0)),    # ||e||^2 sentinel
            pl.BlockSpec((d, k_pad), lambda i: (0, 0)),    # codebook^T, resident
        ],
        out_specs=(
            pl.BlockSpec((d, tn), lambda i: (0, i)),       # quantized^T tile
            pl.BlockSpec((1, k_pad), lambda i: (i, 0)),    # per-step partial counts
        ),
        out_shape=(
            jax.ShapeDtypeStruct((d, n_pad), jnp.float32),
            jax.ShapeDtypeStruct((nt, k_pad), jnp.float32),
        ),
        compiler_params=pltpu.CompilerParams(
            # Every output block is written exactly once (disjoint per step), so
            # the grid axis is truly parallel -> megacore sharding on v7x.
            dimension_semantics=("parallel",),
            vmem_limit_bytes=vmem_limit,
        ),
    )(x_t.astype(jnp.float32), em2, e2, et)

    return q_t[:, :n], jnp.sum(counts, axis=0)[:k]


def vector_quantizer_forward(x, embeddings, commitment_cost):
    """x: (B, C, H, W) with C == embedding_dim. Returns (quantized, loss, perplexity)."""
    B, C, H, W = x.shape
    K, D = embeddings.shape
    assert C == D
    n = B * H * W

    # (x.permute(0,2,3,1).reshape(-1, D))^T  ->  (D, N); columns are the flattened
    # NHWC rows, so the kernel's input/output tiles are lane-dense.
    x_t = jnp.transpose(x.astype(jnp.float32), (1, 0, 2, 3)).reshape(D, n)

    q_t, counts = vq_pallas(x_t, embeddings)

    # NHWC-ordered flat buffer reinterpreted as x.shape (matches torch's .view()).
    q_flat = jnp.transpose(q_t)                    # (N, D)
    quantized = q_flat.reshape(x.shape)

    # Forward values: e_latent_loss == q_latent_loss == mse(quantized, x).
    # TODO(synk): gradient semantics (detach split + straight-through backward)
    # are not reproduced — no custom_vjp; forward values match the reference.
    mse = jnp.mean((quantized - x.astype(jnp.float32)) ** 2)
    loss = mse + commitment_cost * mse

    # Straight-through estimator (forward value is just `quantized`).
    quantized_st = x + jax.lax.stop_gradient(quantized - x)

    avg_probs = counts / jnp.float32(n)
    perplexity = jnp.exp(-jnp.sum(avg_probs * jnp.log(avg_probs + 1e-10)))

    return quantized_st, loss, perplexity


if __name__ == "__main__":
    num_embeddings = 8
    embedding_dim = 4
    commitment_cost = 0.25

    key = jax.random.PRNGKey(0)
    k_emb, k_x = jax.random.split(key)

    # nn.Embedding weight init: uniform(-1/K, 1/K), shape (K, D)
    embeddings = jax.random.uniform(
        k_emb, (num_embeddings, embedding_dim), jnp.float32,
        minval=-1.0 / num_embeddings, maxval=1.0 / num_embeddings)

    # Input x in NCHW, channels == embedding_dim
    x = jax.random.normal(k_x, (2, embedding_dim, 16, 16), jnp.float32)

    quantized, loss, perplexity = jax.jit(
        lambda x, e: vector_quantizer_forward(x, e, commitment_cost)
    )(x, embeddings)

    jax.block_until_ready((quantized, loss, perplexity))
    assert quantized.shape == x.shape
    assert loss.shape == () and perplexity.shape == ()
    print("KERNEL_OK")
</pallas_src>

<mosaic_0001>
module attributes {stable_mosaic.version = 11 : i64} {
  func.func @_vq_kernel(%arg0: i32, %arg1: memref<4x512xf32, #tpu.memory_space<vmem>>, %arg2: memref<128x4xf32, #tpu.memory_space<vmem>>, %arg3: memref<128x1xf32, #tpu.memory_space<vmem>>, %arg4: memref<4x128xf32, #tpu.memory_space<vmem>>, %arg5: memref<4x512xf32, #tpu.memory_space<vmem>>, %arg6: memref<1x128xf32, #tpu.memory_space<vmem>>) attributes {dimension_semantics = [#tpu.dimension_semantics<parallel>], iteration_bounds = array<i64: 1>, scalar_prefetch = 0 : i64, scratch_operands = 0 : i64, tpu.core_type = #tpu.core_type<tc>, window_params = [{transform_indices = @transform_0, window_bounds = array<i64: 4, 512>}, {pipeline_mode = #tpu.pipeline_mode<synchronous>, transform_indices = @transform_1, window_bounds = array<i64: 128, 4>}, {pipeline_mode = #tpu.pipeline_mode<synchronous>, transform_indices = @transform_2, window_bounds = array<i64: 128, 1>}, {pipeline_mode = #tpu.pipeline_mode<synchronous>, transform_indices = @transform_3, window_bounds = array<i64: 4, 128>}, {transform_indices = @transform_4, window_bounds = array<i64: 4, 512>}, {transform_indices = @transform_5, window_bounds = array<i64: 1, 128>}]} {
    %c0 = arith.constant 0 : index
    %c0_0 = arith.constant 0 : index
    %0 = vector.load %arg1[%c0, %c0_0] : memref<4x512xf32, #tpu.memory_space<vmem>>, vector<4x512xf32>
    %c0_1 = arith.constant 0 : index
    %c0_2 = arith.constant 0 : index
    %1 = vector.load %arg2[%c0_1, %c0_2] : memref<128x4xf32, #tpu.memory_space<vmem>>, vector<128x4xf32>
    %cst = arith.constant dense<0.000000e+00> : vector<128x512xf32>
    %2 = tpu.matmul %1, %0, %cst {dimension_numbers = #tpu.dot_dimension_numbers<[1], [0], [0], [1], [0, 0, 1, 1], [], []>} : vector<128x4xf32>, vector<4x512xf32>, vector<128x512xf32> -> vector<128x512xf32>
    %c0_3 = arith.constant 0 : index
    %c0_4 = arith.constant 0 : index
    %3 = vector.load %arg3[%c0_3, %c0_4] : memref<128x1xf32, #tpu.memory_space<vmem>>, vector<128x1xf32>
    %4 = vector.broadcast %3 : vector<128x1xf32> to vector<128x512xf32>
    %5 = arith.addf %2, %4 : vector<128x512xf32>
    %6 = tpu.iota {dimensions = array<i32: 0>} : vector<128x512xi32>
    %cst_5 = arith.constant dense<0x7F800000> : vector<512xf32>
    %7 = vector.multi_reduction <minimumf>, %5, %cst_5 [0] : vector<128x512xf32> to vector<512xf32>
    %8 = vector.shape_cast %7 : vector<512xf32> to vector<1x512xf32>
    %9 = vector.broadcast %8 : vector<1x512xf32> to vector<128x512xf32>
    %10 = arith.cmpf ole, %5, %9 : vector<128x512xf32>
    %c2147483647_i32 = arith.constant 2147483647 : i32
    %11 = vector.broadcast %c2147483647_i32 : i32 to vector<128x512xi32>
    %12 = arith.select %10, %6, %11 : vector<128x512xi1>, vector<128x512xi32>
    %cst_6 = arith.constant dense<2147483647> : vector<512xi32>
    %13 = vector.multi_reduction <minsi>, %12, %cst_6 [0] : vector<128x512xi32> to vector<512xi32>
    %14 = vector.shape_cast %13 : vector<512xi32> to vector<1x512xi32>
    %15 = vector.broadcast %14 : vector<1x512xi32> to vector<128x512xi32>
    %16 = arith.cmpi eq, %6, %15 : vector<128x512xi32>
    %17 = arith.extui %16 : vector<128x512xi1> to vector<128x512xi32>
    %18 = arith.sitofp %17 : vector<128x512xi32> to vector<128x512xf32>
    %c0_7 = arith.constant 0 : index
    %c0_8 = arith.constant 0 : index
    %19 = vector.load %arg4[%c0_7, %c0_8] : memref<4x128xf32, #tpu.memory_space<vmem>>, vector<4x128xf32>
    %cst_9 = arith.constant dense<0.000000e+00> : vector<4x512xf32>
    %20 = tpu.matmul %19, %18, %cst_9 {dimension_numbers = #tpu.dot_dimension_numbers<[1], [0], [0], [1], [0, 0, 1, 1], [], []>} : vector<4x128xf32>, vector<128x512xf32>, vector<4x512xf32> -> vector<4x512xf32>
    %c0_10 = arith.constant 0 : index
    %c0_11 = arith.constant 0 : index
    %21 = vector.load %arg5[%c0_10, %c0_11] : memref<4x512xf32, #tpu.memory_space<vmem>>, vector<4x512xf32>
    tpu.vector_store %arg5[%c0_10, %c0_11], %20 {strides = array<i32>} : memref<4x512xf32, #tpu.memory_space<vmem>>, vector<4x512xf32>,
    %cst_12 = arith.constant 1.000000e+00 : f32
    %22 = vector.broadcast %cst_12 : f32 to vector<1x512xf32>
    %cst_13 = arith.constant dense<0.000000e+00> : vector<1x128xf32>
    %23 = tpu.matmul %22, %18, %cst_13 {dimension_numbers = #tpu.dot_dimension_numbers<[1], [1], [0], [0], [0, 0, 1, 0], [], []>} : vector<1x512xf32>, vector<128x512xf32>, vector<1x128xf32> -> vector<1x128xf32>
    %c0_14 = arith.constant 0 : index
    %c0_15 = arith.constant 0 : index
    %24 = vector.load %arg6[%c0_14, %c0_15] : memref<1x128xf32, #tpu.memory_space<vmem>>, vector<1x128xf32>
    tpu.vector_store %arg6[%c0_14, %c0_15], %23 {strides = array<i32>} : memref<1x128xf32, #tpu.memory_space<vmem>>, vector<1x128xf32>,
    return
  }
  func.func @transform_0(%arg0: i32) -> (i32, i32) {
    %c0_i32 = arith.constant 0 : i32
    %c0_i32_0 = arith.constant 0 : i32
    return %c0_i32, %arg0 : i32, i32
  }
  func.func @transform_1(%arg0: i32) -> (i32, i32) {
    %c0_i32 = arith.constant 0 : i32
    %c0_i32_0 = arith.constant 0 : i32
    %c0_i32_1 = arith.constant 0 : i32
    return %c0_i32, %c0_i32_0 : i32, i32
  }
  func.func @transform_2(%arg0: i32) -> (i32, i32) {
    %c0_i32 = arith.constant 0 : i32
    %c0_i32_0 = arith.constant 0 : i32
    %c0_i32_1 = arith.constant 0 : i32
    return %c0_i32, %c0_i32_0 : i32, i32
  }
  func.func @transform_3(%arg0: i32) -> (i32, i32) {
    %c0_i32 = arith.constant 0 : i32
    %c0_i32_0 = arith.constant 0 : i32
    %c0_i32_1 = arith.constant 0 : i32
    return %c0_i32, %c0_i32_0 : i32, i32
  }
  func.func @transform_4(%arg0: i32) -> (i32, i32) {
    %c0_i32 = arith.constant 0 : i32
    %c0_i32_0 = arith.constant 0 : i32
    return %c0_i32, %arg0 : i32, i32
  }
  func.func @transform_5(%arg0: i32) -> (i32, i32) {
    %c0_i32 = arith.constant 0 : i32
    %c0_i32_0 = arith.constant 0 : i32
    return %arg0, %c0_i32 : i32, i32
  }
}

</mosaic_0001>

<llo_original>
// kernel: _lambda_.1
$region0: #{_lambda_.1}
  #allocation0 [shape = 'u32[]', space=smem, size = 0x4, offset = 0x4, fixed_abs, tag = 'smem constant byte address 0x4 - core index']
  #allocation1 [shape = 'u32[144,128]{1,0:T(1,128)}', space=vmem, size = 0x12000, scoped, tag = 'internal scratch']
  %s0 = inlined_call_operand.vmem [shape: f32[4,512], index: 0, kind: input, shape index: {}]
  %s1 = inlined_call_operand.vmem [shape: f32[128,4], index: 1, kind: input, shape index: {}]
  %s2 = inlined_call_operand.vmem [shape: f32[128,1], index: 2, kind: input, shape index: {}]
  %s3 = inlined_call_operand.vmem [shape: f32[4,128], index: 3, kind: input, shape index: {}]
  %s4 = inlined_call_operand.vmem [shape: f32[4,512], index: 4, kind: output, shape index: {0}]
  %s5 = inlined_call_operand.vmem [shape: f32[1,128], index: 5, kind: output, shape index: {1}]
  %6 = xla_tuple %s4, %s5
  %s7 = sld [smem:[#allocation0]]
  $region34: #{_lambda_.1} parent=0
    _
  %s9 = ssub.s32 1, %s7
  %s10 = scalar_select 0, %s9, %s7
  // Predicated region
  $region2: #{_lambda_.1} parent=0 // pred_check
    _
  $region3: #{_lambda_.1} parent=0 // pred_check_branch
    %12 = sbr.rel (0) target = $region5
  $region4: #{_lambda_.1} parent=0 // pred_region
    _
  $region5: #{_lambda_.1} parent=0 // pred_fallthru
    _
  // Predicated region
  $region6: #{_lambda_.1} parent=0 // pred_check
    _
  $region7: #{_lambda_.1} parent=0 // pred_check_branch
    %14 = sbr.rel (0) target = $region9
  $region8: #{_lambda_.1} parent=0 // pred_region
    _
  $region9: #{_lambda_.1} parent=0 // pred_fallthru
    _
  // Predicated region
  $region10: #{_lambda_.1} parent=0 // pred_check
    _
  $region11: #{_lambda_.1} parent=0 // pred_check_branch
    %16 = sbr.rel (0) target = $region13
  $region12: #{_lambda_.1} parent=0 // pred_region
    _
  $region13: #{_lambda_.1} parent=0 // pred_fallthru
    _
  // Predicated region
  $region14: #{_lambda_.1} parent=0 // pred_check
    _
  $region15: #{_lambda_.1} parent=0 // pred_check_branch
    %18 = sbr.rel (0) target = $region17
  $region16: #{_lambda_.1} parent=0 // pred_region
    _
  $region17: #{_lambda_.1} parent=0 // pred_fallthru
    _
  %v19 = vld [vmem:[%s0] sm:$0xff]
  %v20 = vld [vmem:[%s0 + $0x8] sm:$0xff]
  %v21 = vld [vmem:[%s1] sm:$0xff]
  %v22 = vld [vmem:[%s1 + $0x8] sm:$0xff]
  %v23 = vld [vmem:[%s1 + $0x10] sm:$0xff]
  %v24 = vld [vmem:[%s1 + $0x18] sm:$0xff]
  %v25 = vld [vmem:[%s1 + $0x20] sm:$0xff]
  %v26 = vld [vmem:[%s1 + $0x28] sm:$0xff]
  %v27 = vld [vmem:[%s1 + $0x30] sm:$0xff]
  %v28 = vld [vmem:[%s1 + $0x38] sm:$0xff]
  %v29 = vld [vmem:[%s1 + $0x40] sm:$0xff]
  %v30 = vld [vmem:[%s1 + $0x48] sm:$0xff]
  %v31 = vld [vmem:[%s1 + $0x50] sm:$0xff]
  %v32 = vld [vmem:[%s1 + $0x58] sm:$0xff]
  %v33 = vld [vmem:[%s1 + $0x60] sm:$0xff]
  %v34 = vld [vmem:[%s1 + $0x68] sm:$0xff]
  %v35 = vld [vmem:[%s1 + $0x70] sm:$0xff]
  %v36 = vld [vmem:[%s1 + $0x78] sm:$0xff]
  %v37 = vld [vmem:[%s2] sm:$0xff]
  %v38 = vld [vmem:[%s2 + $0x8] sm:$0xff]
  %v39 = vld [vmem:[%s2 + $0x10] sm:$0xff]
  %v40 = vld [vmem:[%s2 + $0x18] sm:$0xff]
  %v41 = vld [vmem:[%s2 + $0x20] sm:$0xff]
  %v42 = vld [vmem:[%s2 + $0x28] sm:$0xff]
  %v43 = vld [vmem:[%s2 + $0x30] sm:$0xff]
  %v44 = vld [vmem:[%s2 + $0x38] sm:$0xff]
  %v45 = vld [vmem:[%s2 + $0x40] sm:$0xff]
  %v46 = vld [vmem:[%s2 + $0x48] sm:$0xff]
  %v47 = vld [vmem:[%s2 + $0x50] sm:$0xff]
  %v48 = vld [vmem:[%s2 + $0x58] sm:$0xff]
  %v49 = vld [vmem:[%s2 + $0x60] sm:$0xff]
  %v50 = vld [vmem:[%s2 + $0x68] sm:$0xff]
  %v51 = vld [vmem:[%s2 + $0x70] sm:$0xff]
  %v52 = vld [vmem:[%s2 + $0x78] sm:$0xff]
  %54 = vset.pattern.permute.xlu0 0
  %55 = vperm.xlu0 %54, %v37
  %v56 = vpop.permute.xlu0 %55
  %59 = vset.pattern.permute.xlu0 0
  %60 = vperm.xlu0 %59, %v38
  %v61 = vpop.permute.xlu0 %60
  %64 = vset.pattern.permute.xlu0 0
  %65 = vperm.xlu0 %64, %v39
  %v66 = vpop.permute.xlu0 %65
  %69 = vset.pattern.permute.xlu0 0
  %70 = vperm.xlu0 %69, %v40
  %v71 = vpop.permute.xlu0 %70
  %74 = vset.pattern.permute.xlu0 0
  %75 = vperm.xlu0 %74, %v41
  %v76 = vpop.permute.xlu0 %75
  %79 = vset.pattern.permute.xlu0 0
  %80 = vperm.xlu0 %79, %v42
  %v81 = vpop.permute.xlu0 %80
  %84 = vset.pattern.permute.xlu0 0
  %85 = vperm.xlu0 %84, %v43
  %v86 = vpop.permute.xlu0 %85
  %89 = vset.pattern.permute.xlu0 0
  %90 = vperm.xlu0 %89, %v44
  %v91 = vpop.permute.xlu0 %90
  %94 = vset.pattern.permute.xlu0 0
  %95 = vperm.xlu0 %94, %v45
  %v96 = vpop.permute.xlu0 %95
  %99 = vset.pattern.permute.xlu0 0
  %100 = vperm.xlu0 %99, %v46
  %v101 = vpop.permute.xlu0 %100
  %104 = vset.pattern.permute.xlu0 0
  %105 = vperm.xlu0 %104, %v47
  %v106 = vpop.permute.xlu0 %105
  %109 = vset.pattern.permute.xlu0 0
  %110 = vperm.xlu0 %109, %v48
  %v111 = vpop.permute.xlu0 %110
  %114 = vset.pattern.permute.xlu0 0
  %115 = vperm.xlu0 %114, %v49
  %v116 = vpop.permute.xlu0 %115
  %119 = vset.pattern.permute.xlu0 0
  %120 = vperm.xlu0 %119, %v50
  %v121 = vpop.permute.xlu0 %120
  %124 = vset.pattern.permute.xlu0 0
  %125 = vperm.xlu0 %124, %v51
  %v126 = vpop.permute.xlu0 %125
  %129 = vset.pattern.permute.xlu0 0
  %130 = vperm.xlu0 %129, %v52
  %v131 = vpop.permute.xlu0 %130
  %v135 = vcombine.high %v19, %v19
  %v136 = vcombine.high %v20, %v20
  %vm137 = vcmask 31744
  %v139 = vsel %vm137, %v21, 0
  %v142 = vsel %vm137, %v22, 0
  %v145 = vsel %vm137, %v23, 0
  %v148 = vsel %vm137, %v24, 0
  %v151 = vsel %vm137, %v25, 0
  %v154 = vsel %vm137, %v26, 0
  %v157 = vsel %vm137, %v27, 0
  %v160 = vsel %vm137, %v28, 0
  %v163 = vsel %vm137, %v29, 0
  %v166 = vsel %vm137, %v30, 0
  %v169 = vsel %vm137, %v31, 0
  %v172 = vsel %vm137, %v32, 0
  %v175 = vsel %vm137, %v33, 0
  %v178 = vsel %vm137, %v34, 0
  %v181 = vsel %vm137, %v35, 0
  %v184 = vsel %vm137, %v36, 0
  %vm186 = vcmask 1043456
  %v187 = vsel %vm186, %v19, 0
  %v189 = vsel %vm186, %v135, 0
  %v191 = vsel %vm186, %v20, 0
  %v193 = vsel %vm186, %v136, 0
  %195 = vmatprep.subr.mxu0 %v189
  %196 = vmatpush1.msra.mxu0 %v187
  %197 = vmatprep.subr.mxu0 0.0
  %198 = vmatpush1.msra.mxu0 0.0
  %199 = vmatprep.subr.mxu0 0.0
  %200 = vmatpush1.msra.mxu0 0.0
  %201 = vmatprep.subr.mxu0 0.0
  %202 = vmatpush1.msra.mxu0 0.0
  %203 = vmatprep.subr.mxu0 0.0
  %204 = vmatpush1.msra.mxu0 0.0
  %205 = vmatprep.subr.mxu0 0.0
  %206 = vmatpush1.msra.mxu0 0.0
  %207 = vmatprep.subr.mxu0 0.0
  %208 = vmatpush1.msra.mxu0 0.0
  %209 = vmatprep.subr.mxu0 0.0
  %210 = vmatpush1.msra.mxu0 0.0
  %211 = vmatprep.subr.mxu0 0.0
  %212 = vmatpush1.msra.mxu0 0.0
  %213 = vmatprep.subr.mxu0 0.0
  %214 = vmatpush1.msra.mxu0 0.0
  %215 = vmatprep.subr.mxu0 0.0
  %216 = vmatpush1.msra.mxu0 0.0
  %217 = vmatprep.subr.mxu0 0.0
  %218 = vmatpush1.msra.mxu0 0.0
  %219 = vmatprep.subr.mxu0 0.0
  %220 = vmatpush1.msra.mxu0 0.0
  %221 = vmatprep.subr.mxu0 0.0
  %222 = vmatpush1.msra.mxu0 0.0
  %223 = vmatprep.subr.mxu0 0.0
  %224 = vmatpush1.msra.mxu0 0.0
  %225 = vmatprep.subr.mxu0 0.0
  %226 = vmatpush1.msra.mxu0 0.0
  %227 = vmatprep.subr.mxu0 0.0
  %228 = vmatpush1.msra.mxu0 0.0
  %229 = vmatprep.subr.mxu0 0.0
  %230 = vmatpush1.msra.mxu0 0.0
  %231 = vmatprep.subr.mxu0 0.0
  %232 = vmatpush1.msra.mxu0 0.0
  %233 = vmatprep.subr.mxu0 0.0
  %234 = vmatpush1.msra.mxu0 0.0
  %235 = vmatprep.subr.mxu0 0.0
  %236 = vmatpush1.msra.mxu0 0.0
  %237 = vmatprep.subr.mxu0 0.0
  %238 = vmatpush1.msra.mxu0 0.0
  %239 = vmatprep.subr.mxu0 0.0
  %240 = vmatpush1.msra.mxu0 0.0
  %241 = vmatprep.subr.mxu0 0.0
  %242 = vmatpush1.msra.mxu0 0.0
  %243 = vmatprep.subr.mxu0 0.0
  %244 = vmatpush1.msra.mxu0 0.0
  %245 = vmatprep.subr.mxu0 0.0
  %246 = vmatpush1.msra.mxu0 0.0
  %247 = vmatprep.subr.mxu0 0.0
  %248 = vmatpush1.msra.mxu0 0.0
  %249 = vmatprep.subr.mxu0 0.0
  %250 = vmatpush1.msra.mxu0 0.0
  %251 = vmatprep.subr.mxu0 0.0
  %252 = vmatpush1.msra.mxu0 0.0
  %253 = vmatprep.subr.mxu0 0.0
  %254 = vmatpush1.msra.mxu0 0.0
  %255 = vmatprep.subr.mxu0 0.0
  %256 = vmatpush1.msra.mxu0 0.0
  %257 = vmatprep.subr.mxu0 0.0
  %258 = vmatpush1.msra.mxu0 0.0
  %259 = vmatprep.mubr.f32.mxu0 0.0
  %260 = vmatmul.mubr.f32.gmra.mrb[0].mxu0 %v139
  %v261 = vpop.f32.mrb[0].mxu0
  %v262 = vadd.f32 %v56, %v261
  %v263 = vpop.f32.mrb[0].mxu0
  %v264 = vadd.f32 %v56, %v263
  %265 = vmatprep.mubr.f32.mxu0 0.0
  %266 = vmatmul.mubr.f32.gmra.mrb[0].mxu0 %v142
  %v267 = vpop.f32.mrb[0].mxu0
  %v268 = vadd.f32 %v61, %v267
  %v269 = vpop.f32.mrb[0].mxu0
  %v270 = vadd.f32 %v61, %v269
  %271 = vmatprep.mubr.f32.mxu0 0.0
  %272 = vmatmul.mubr.f32.gmra.mrb[0].mxu0 %v145
  %v273 = vpop.f32.mrb[0].mxu0
  %v274 = vadd.f32 %v66, %v273
  %v275 = vpop.f32.mrb[0].mxu0
  %v276 = vadd.f32 %v66, %v275
  %277 = vmatprep.mubr.f32.mxu0 0.0
  %278 = vmatmul.mubr.f32.gmra.mrb[0].mxu0 %v148
  %v279 = vpop.f32.mrb[0].mxu0
  %v280 = vadd.f32 %v71, %v279
  %v281 = vpop.f32.mrb[0].mxu0
  %v282 = vadd.f32 %v71, %v281
  %283 = vmatprep.mubr.f32.mxu0 0.0
  %284 = vmatmul.mubr.f32.gmra.mrb[0].mxu0 %v151
  %v285 = vpop.f32.mrb[0].mxu0
  %v286 = vadd.f32 %v76, %v285
  %v287 = vpop.f32.mrb[0].mxu0
  %v288 = vadd.f32 %v76, %v287
  %289 = vmatprep.mubr.f32.mxu0 0.0
  %290 = vmatmul.mubr.f32.gmra.mrb[0].mxu0 %v154
  %v291 = vpop.f32.mrb[0].mxu0
  %v292 = vadd.f32 %v81, %v291
  %v293 = vpop.f32.mrb[0].mxu0
  %v294 = vadd.f32 %v81, %v293
  %295 = vmatprep.mubr.f32.mxu0 0.0
  %296 = vmatmul.mubr.f32.gmra.mrb[0].mxu0 %v157
  %v297 = vpop.f32.mrb[0].mxu0
  %v298 = vadd.f32 %v86, %v297
  %v299 = vpop.f32.mrb[0].mxu0
  %v300 = vadd.f32 %v86, %v299
  %301 = vmatprep.mubr.f32.mxu0 0.0
  %302 = vmatmul.mubr.f32.gmra.mrb[0].mxu0 %v160
  %v303 = vpop.f32.mrb[0].mxu0
  %v304 = vadd.f32 %v91, %v303
  %v305 = vpop.f32.mrb[0].mxu0
  %v306 = vadd.f32 %v91, %v305
  %307 = vmatprep.mubr.f32.mxu0 0.0
  %308 = vmatmul.mubr.f32.gmra.mrb[0].mxu0 %v163
  %v309 = vpop.f32.mrb[0].mxu0
  %v310 = vadd.f32 %v96, %v309
  %v311 = vpop.f32.mrb[0].mxu0
  %v312 = vadd.f32 %v96, %v311
  %313 = vmatprep.mubr.f32.mxu0 0.0
  %314 = vmatmul.mubr.f32.gmra.mrb[0].mxu0 %v166
  %v315 = vpop.f32.mrb[0].mxu0
  %v316 = vadd.f32 %v101, %v315
  %v317 = vpop.f32.mrb[0].mxu0
  %v318 = vadd.f32 %v101, %v317
  %319 = vmatprep.mubr.f32.mxu0 0.0
  %320 = vmatmul.mubr.f32.gmra.mrb[0].mxu0 %v169
  %v321 = vpop.f32.mrb[0].mxu0
  %v322 = vadd.f32 %v106, %v321
  %v323 = vpop.f32.mrb[0].mxu0
  %v324 = vadd.f32 %v106, %v323
  %325 = vmatprep.mubr.f32.mxu0 0.0
  %326 = vmatmul.mubr.f32.gmra.mrb[0].mxu0 %v172
  %v327 = vpop.f32.mrb[0].mxu0
  %v328 = vadd.f32 %v111, %v327
  %v329 = vpop.f32.mrb[0].mxu0
  %v330 = vadd.f32 %v111, %v329
  %331 = vmatprep.mubr.f32.mxu0 0.0
  %332 = vmatmul.mubr.f32.gmra.mrb[0].mxu0 %v175
  %v333 = vpop.f32.mrb[0].mxu0
  %v334 = vadd.f32 %v116, %v333
  %v335 = vpop.f32.mrb[0].mxu0
  %v336 = vadd.f32 %v116, %v335
  %337 = vmatprep.mubr.f32.mxu0 0.0
  %338 = vmatmul.mubr.f32.gmra.mrb[0].mxu0 %v178
  %v339 = vpop.f32.mrb[0].mxu0
  %v340 = vadd.f32 %v121, %v339
  %v341 = vpop.f32.mrb[0].mxu0
  %v342 = vadd.f32 %v121, %v341
  %343 = vmatprep.mubr.f32.mxu0 0.0
  %344 = vmatmul.mubr.f32.gmra.mrb[0].mxu0 %v181
  %v345 = vpop.f32.mrb[0].mxu0
  %v346 = vadd.f32 %v126, %v345
  %v347 = vpop.f32.mrb[0].mxu0
  %v348 = vadd.f32 %v126, %v347
  %349 = vmatprep.mubr.f32.mxu0 0.0
  %350 = vmatmul.mubr.f32.gmra.mrb[0].mxu0 %v184
  %v351 = vpop.f32.mrb[0].mxu0
  %v352 = vadd.f32 %v131, %v351
  %v353 = vpop.f32.mrb[0].mxu0
  %v354 = vadd.f32 %v131, %v353
  %355 = vdwg.mxu0
  %356 = vmatprep.subr.mxu0 %v193
  %357 = vmatpush1.msra.mxu0 %v191
  %358 = vmatprep.subr.mxu0 0.0
  %359 = vmatpush1.msra.mxu0 0.0
  %360 = vmatprep.subr.mxu0 0.0
  %361 = vmatpush1.msra.mxu0 0.0
  %362 = vmatprep.subr.mxu0 0.0
  %363 = vmatpush1.msra.mxu0 0.0
  %364 = vmatprep.subr.mxu0 0.0
  %365 = vmatpush1.msra.mxu0 0.0
  %366 = vmatprep.subr.mxu0 0.0
  %367 = vmatpush1.msra.mxu0 0.0
  %368 = vmatprep.subr.mxu0 0.0
  %369 = vmatpush1.msra.mxu0 0.0
  %370 = vmatprep.subr.mxu0 0.0
  %371 = vmatpush1.msra.mxu0 0.0
  %372 = vmatprep.subr.mxu0 0.0
  %373 = vmatpush1.msra.mxu0 0.0
  %374 = vmatprep.subr.mxu0 0.0
  %375 = vmatpush1.msra.mxu0 0.0
  %376 = vmatprep.subr.mxu0 0.0
  %377 = vmatpush1.msra.mxu0 0.0
  %378 = vmatprep.subr.mxu0 0.0
  %379 = vmatpush1.msra.mxu0 0.0
  %380 = vmatprep.subr.mxu0 0.0
  %381 = vmatpush1.msra.mxu0 0.0
  %382 = vmatprep.subr.mxu0 0.0
  %383 = vmatpush1.msra.mxu0 0.0
  %384 = vmatprep.subr.mxu0 0.0
  %385 = vmatpush1.msra.mxu0 0.0
  %386 = vmatprep.subr.mxu0 0.0
  %387 = vmatpush1.msra.mxu0 0.0
  %388 = vmatprep.subr.mxu0 0.0
  %389 = vmatpush1.msra.mxu0 0.0
  %390 = vmatprep.subr.mxu0 0.0
  %391 = vmatpush1.msra.mxu0 0.0
  %392 = vmatprep.subr.mxu0 0.0
  %393 = vmatpush1.msra.mxu0 0.0
  %394 = vmatprep.subr.mxu0 0.0
  %395 = vmatpush1.msra.mxu0 0.0
  %396 = vmatprep.subr.mxu0 0.0
  %397 = vmatpush1.msra.mxu0 0.0
  %398 = vmatprep.subr.mxu0 0.0
  %399 = vmatpush1.msra.mxu0 0.0
  %400 = vmatprep.subr.mxu0 0.0
  %401 = vmatpush1.msra.mxu0 0.0
  %402 = vmatprep.subr.mxu0 0.0
  %403 = vmatpush1.msra.mxu0 0.0
  %404 = vmatprep.subr.mxu0 0.0
  %405 = vmatpush1.msra.mxu0 0.0
  %406 = vmatprep.subr.mxu0 0.0
  %407 = vmatpush1.msra.mxu0 0.0
  %408 = vmatprep.subr.mxu0 0.0
  %409 = vmatpush1.msra.mxu0 0.0
  %410 = vmatprep.subr.mxu0 0.0
  %411 = vmatpush1.msra.mxu0 0.0
  %412 = vmatprep.subr.mxu0 0.0
  %413 = vmatpush1.msra.mxu0 0.0
  %414 = vmatprep.subr.mxu0 0.0
  %415 = vmatpush1.msra.mxu0 0.0
  %416 = vmatprep.subr.mxu0 0.0
  %417 = vmatpush1.msra.mxu0 0.0
  %418 = vmatprep.subr.mxu0 0.0
  %419 = vmatpush1.msra.mxu0 0.0
  %420 = vmatprep.mubr.f32.mxu0 0.0
  %421 = vmatmul.mubr.f32.gmra.mrb[0].mxu0 %v139
  %v422 = vpop.f32.mrb[0].mxu0
  %v423 = vadd.f32 %v56, %v422
  %v424 = vpop.f32.mrb[0].mxu0
  %v425 = vadd.f32 %v56, %v424
  %426 = vmatprep.mubr.f32.mxu0 0.0
  %427 = vmatmul.mubr.f32.gmra.mrb[0].mxu0 %v142
  %v428 = vpop.f32.mrb[0].mxu0
  %v429 = vadd.f32 %v61, %v428
  %v430 = vpop.f32.mrb[0].mxu0
  %v431 = vadd.f32 %v61, %v430
  %432 = vmatprep.mubr.f32.mxu0 0.0
  %433 = vmatmul.mubr.f32.gmra.mrb[0].mxu0 %v145
  %v434 = vpop.f32.mrb[0].mxu0
  %v435 = vadd.f32 %v66, %v434
  %v436 = vpop.f32.mrb[0].mxu0
  %v437 = vadd.f32 %v66, %v436
  %438 = vmatprep.mubr.f32.mxu0 0.0
  %439 = vmatmul.mubr.f32.gmra.mrb[0].mxu0 %v148
  %v440 = vpop.f32.mrb[0].mxu0
  %v441 = vadd.f32 %v71, %v440
  %v442 = vpop.f32.mrb[0].mxu0
  %v443 = vadd.f32 %v71, %v442
  %444 = vmatprep.mubr.f32.mxu0 0.0
  %445 = vmatmul.mubr.f32.gmra.mrb[0].mxu0 %v151
  %v446 = vpop.f32.mrb[0].mxu0
  %v447 = vadd.f32 %v76, %v446
  %v448 = vpop.f32.mrb[0].mxu0
  %v449 = vadd.f32 %v76, %v448
  %450 = vmatprep.mubr.f32.mxu0 0.0
  %451 = vmatmul.mubr.f32.gmra.mrb[0].mxu0 %v154
  %v452 = vpop.f32.mrb[0].mxu0
  %v453 = vadd.f32 %v81, %v452
  %v454 = vpop.f32.mrb[0].mxu0
  %v455 = vadd.f32 %v81, %v454
  %456 = vmatprep.mubr.f32.mxu0 0.0
  %457 = vmatmul.mubr.f32.gmra.mrb[0].mxu0 %v157
  %v458 = vpop.f32.mrb[0].mxu0
  %v459 = vadd.f32 %v86, %v458
  %v460 = vpop.f32.mrb[0].mxu0
  %v461 = vadd.f32 %v86, %v460
  %462 = vmatprep.mubr.f32.mxu0 0.0
  %463 = vmatmul.mubr.f32.gmra.mrb[0].mxu0 %v160
  %v464 = vpop.f32.mrb[0].mxu0
  %v465 = vadd.f32 %v91, %v464
  %v466 = vpop.f32.mrb[0].mxu0
  %v467 = vadd.f32 %v91, %v466
  %468 = vmatprep.mubr.f32.mxu0 0.0
  %469 = vmatmul.mubr.f32.gmra.mrb[0].mxu0 %v163
  %v470 = vpop.f32.mrb[0].mxu0
  %v471 = vadd.f32 %v96, %v470
  %v472 = vpop.f32.mrb[0].mxu0
  %v473 = vadd.f32 %v96, %v472
  %474 = vmatprep.mubr.f32.mxu0 0.0
  %475 = vmatmul.mubr.f32.gmra.mrb[0].mxu0 %v166
  %v476 = vpop.f32.mrb[0].mxu0
  %v477 = vadd.f32 %v101, %v476
  %v478 = vpop.f32.mrb[0].mxu0
  %v479 = vadd.f32 %v101, %v478
  %480 = vmatprep.mubr.f32.mxu0 0.0
  %481 = vmatmul.mubr.f32.gmra.mrb[0].mxu0 %v169
  %v482 = vpop.f32.mrb[0].mxu0
  %v483 = vadd.f32 %v106, %v482
  %v484 = vpop.f32.mrb[0].mxu0
  %v485 = vadd.f32 %v106, %v484
  %486 = vmatprep.mubr.f32.mxu0 0.0
  %487 = vmatmul.mubr.f32.gmra.mrb[0].mxu0 %v172
  %v488 = vpop.f32.mrb[0].mxu0
  %v489 = vadd.f32 %v111, %v488
  %v490 = vpop.f32.mrb[0].mxu0
  %v491 = vadd.f32 %v111, %v490
  %492 = vmatprep.mubr.f32.mxu0 0.0
  %493 = vmatmul.mubr.f32.gmra.mrb[0].mxu0 %v175
  %v494 = vpop.f32.mrb[0].mxu0
  %v495 = vadd.f32 %v116, %v494
  %v496 = vpop.f32.mrb[0].mxu0
  %v497 = vadd.f32 %v116, %v496
  %498 = vmatprep.mubr.f32.mxu0 0.0
  %499 = vmatmul.mubr.f32.gmra.mrb[0].mxu0 %v178
  %v500 = vpop.f32.mrb[0].mxu0
  %v501 = vadd.f32 %v121, %v500
  %v502 = vpop.f32.mrb[0].mxu0
  %v503 = vadd.f32 %v121, %v502
  %504 = vmatprep.mubr.f32.mxu0 0.0
  %505 = vmatmul.mubr.f32.gmra.mrb[0].mxu0 %v181
  %v506 = vpop.f32.mrb[0].mxu0
  %v507 = vadd.f32 %v126, %v506
  %v508 = vpop.f32.mrb[0].mxu0
  %v509 = vadd.f32 %v126, %v508
  %510 = vmatprep.mubr.f32.mxu0 0.0
  %511 = vmatmul.mubr.f32.gmra.mrb[0].mxu0 %v184
  %v512 = vpop.f32.mrb[0].mxu0
  %v513 = vadd.f32 %v131, %v512
  %v514 = vpop.f32.mrb[0].mxu0
  %v515 = vadd.f32 %v131, %v514
  %516 = vdwg.mxu0
  %v517 = vlaneseq
  %v518 = vshrl.u32 %v517, 7
  %v519 = vadd.s32 %v518, 8
  %v520 = vadd.s32 %v518, 16
  %v521 = vadd.s32 %v518, 24
  %v522 = vadd.s32 %v518, 32
  %v523 = vadd.s32 %v518, 40
  %v524 = vadd.s32 %v518, 48
  %v525 = vadd.s32 %v518, 56
  %v526 = vadd.s32 %v518, 64
  %v527 = vadd.s32 %v518, 72
  %v528 = vadd.s32 %v518, 80
  %v529 = vadd.s32 %v518, 88
  %v530 = vadd.s32 %v518, 96
  %v531 = vadd.s32 %v518, 104
  %v532 = vadd.s32 %v518, 112
  %v533 = vadd.s32 %v518, 120
  %v534 = vmin.f32 %v262, %v268
  %v535 = vmin.f32 %v534, %v274
  %v536 = vmin.f32 %v535, %v280
  %v537 = vmin.f32 %v536, %v286
  %v538 = vmin.f32 %v537, %v292
  %v539 = vmin.f32 %v538, %v298
  %v540 = vmin.f32 %v539, %v304
  %v541 = vmin.f32 %v540, %v310
  %v542 = vmin.f32 %v541, %v316
  %v543 = vmin.f32 %v542, %v322
  %v544 = vmin.f32 %v543, %v328
  %v545 = vmin.f32 %v544, %v334
  %v546 = vmin.f32 %v545, %v340
  %v547 = vmin.f32 %v546, %v346
  %v548 = vmin.f32 %v547, %v352
  %v549 = vrot.slane %v548, 4
  %v550 = vmin.f32 %v548, %v549
  %v551 = vrot.slane %v550, 2
  %v552 = vmin.f32 %v550, %v551
  %v553 = vrot.slane %v552, 1
  %v554 = vmin.f32 %v552, %v553
  %v555 = vmin.f32 %v264, %v270
  %v556 = vmin.f32 %v555, %v276
  %v557 = vmin.f32 %v556, %v282
  %v558 = vmin.f32 %v557, %v288
  %v559 = vmin.f32 %v558, %v294
  %v560 = vmin.f32 %v559, %v300
  %v561 = vmin.f32 %v560, %v306
  %v562 = vmin.f32 %v561, %v312
  %v563 = vmin.f32 %v562, %v318
  %v564 = vmin.f32 %v563, %v324
  %v565 = vmin.f32 %v564, %v330
  %v566 = vmin.f32 %v565, %v336
  %v567 = vmin.f32 %v566, %v342
  %v568 = vmin.f32 %v567, %v348
  %v569 = vmin.f32 %v568, %v354
  %v570 = vrot.slane %v569, 4
  %v571 = vmin.f32 %v569, %v570
  %v572 = vrot.slane %v571, 2
  %v573 = vmin.f32 %v571, %v572
  %v574 = vrot.slane %v573, 1
  %v575 = vmin.f32 %v573, %v574
  %v576 = vmin.f32 %v423, %v429
  %v577 = vmin.f32 %v576, %v435
  %v578 = vmin.f32 %v577, %v441
  %v579 = vmin.f32 %v578, %v447
  %v580 = vmin.f32 %v579, %v453
  %v581 = vmin.f32 %v580, %v459
  %v582 = vmin.f32 %v581, %v465
  %v583 = vmin.f32 %v582, %v471
  %v584 = vmin.f32 %v583, %v477
  %v585 = vmin.f32 %v584, %v483
  %v586 = vmin.f32 %v585, %v489
  %v587 = vmin.f32 %v586, %v495
  %v588 = vmin.f32 %v587, %v501
  %v589 = vmin.f32 %v588, %v507
  %v590 = vmin.f32 %v589, %v513
  %v591 = vrot.slane %v590, 4
  %v592 = vmin.f32 %v590, %v591
  %v593 = vrot.slane %v592, 2
  %v594 = vmin.f32 %v592, %v593
  %v595 = vrot.slane %v594, 1
  %v596 = vmin.f32 %v594, %v595
  %v597 = vmin.f32 %v425, %v431
  %v598 = vmin.f32 %v597, %v437
  %v599 = vmin.f32 %v598, %v443
  %v600 = vmin.f32 %v599, %v449
  %v601 = vmin.f32 %v600, %v455
  %v602 = vmin.f32 %v601, %v461
  %v603 = vmin.f32 %v602, %v467
  %v604 = vmin.f32 %v603, %v473
  %v605 = vmin.f32 %v604, %v479
  %v606 = vmin.f32 %v605, %v485
  %v607 = vmin.f32 %v606, %v491
  %v608 = vmin.f32 %v607, %v497
  %v609 = vmin.f32 %v608, %v503
  %v610 = vmin.f32 %v609, %v509
  %v611 = vmin.f32 %v610, %v515
  %v612 = vrot.slane %v611, 4
  %v613 = vmin.f32 %v611, %v612
  %v614 = vrot.slane %v613, 2
  %v615 = vmin.f32 %v613, %v614
  %v616 = vrot.slane %v615, 1
  %v617 = vmin.f32 %v615, %v616
  %vm618 = vcmp.le.f32.partialorder %v262, %v554
  %vm619 = vcmp.le.f32.partialorder %v264, %v575
  %vm620 = vcmp.le.f32.partialorder %v423, %v596
  %vm621 = vcmp.le.f32.partialorder %v425, %v617
  %vm622 = vcmp.le.f32.partialorder %v268, %v554
  %vm623 = vcmp.le.f32.partialorder %v270, %v575
  %vm624 = vcmp.le.f32.partialorder %v429, %v596
  %vm625 = vcmp.le.f32.partialorder %v431, %v617
  %vm626 = vcmp.le.f32.partialorder %v274, %v554
  %vm627 = vcmp.le.f32.partialorder %v276, %v575
  %vm628 = vcmp.le.f32.partialorder %v435, %v596
  %vm629 = vcmp.le.f32.partialorder %v437, %v617
  %vm630 = vcmp.le.f32.partialorder %v280, %v554
  %vm631 = vcmp.le.f32.partialorder %v282, %v575
  %vm632 = vcmp.le.f32.partialorder %v441, %v596
  %vm633 = vcmp.le.f32.partialorder %v443, %v617
  %vm634 = vcmp.le.f32.partialorder %v286, %v554
  %vm635 = vcmp.le.f32.partialorder %v288, %v575
  %vm636 = vcmp.le.f32.partialorder %v447, %v596
  %vm637 = vcmp.le.f32.partialorder %v449, %v617
  %vm638 = vcmp.le.f32.partialorder %v292, %v554
  %vm639 = vcmp.le.f32.partialorder %v294, %v575
  %vm640 = vcmp.le.f32.partialorder %v453, %v596
  %vm641 = vcmp.le.f32.partialorder %v455, %v617
  %vm642 = vcmp.le.f32.partialorder %v298, %v554
  %vm643 = vcmp.le.f32.partialorder %v300, %v575
  %vm644 = vcmp.le.f32.partialorder %v459, %v596
  %vm645 = vcmp.le.f32.partialorder %v461, %v617
  %vm646 = vcmp.le.f32.partialorder %v304, %v554
  %vm647 = vcmp.le.f32.partialorder %v306, %v575
  %vm648 = vcmp.le.f32.partialorder %v465, %v596
  %vm649 = vcmp.le.f32.partialorder %v467, %v617
  %vm650 = vcmp.le.f32.partialorder %v310, %v554
  %vm651 = vcmp.le.f32.partialorder %v312, %v575
  %vm652 = vcmp.le.f32.partialorder %v471, %v596
  %vm653 = vcmp.le.f32.partialorder %v473, %v617
  %vm654 = vcmp.le.f32.partialorder %v316, %v554
  %vm655 = vcmp.le.f32.partialorder %v318, %v575
  %vm656 = vcmp.le.f32.partialorder %v477, %v596
  %vm657 = vcmp.le.f32.partialorder %v479, %v617
  %vm658 = vcmp.le.f32.partialorder %v322, %v554
  %vm659 = vcmp.le.f32.partialorder %v324, %v575
  %vm660 = vcmp.le.f32.partialorder %v483, %v596
  %vm661 = vcmp.le.f32.partialorder %v485, %v617
  %vm662 = vcmp.le.f32.partialorder %v328, %v554
  %vm663 = vcmp.le.f32.partialorder %v330, %v575
  %vm664 = vcmp.le.f32.partialorder %v489, %v596
  %vm665 = vcmp.le.f32.partialorder %v491, %v617
  %vm666 = vcmp.le.f32.partialorder %v334, %v554
  %vm667 = vcmp.le.f32.partialorder %v336, %v575
  %vm668 = vcmp.le.f32.partialorder %v495, %v596
  %vm669 = vcmp.le.f32.partialorder %v497, %v617
  %vm670 = vcmp.le.f32.partialorder %v340, %v554
  %vm671 = vcmp.le.f32.partialorder %v342, %v575
  %vm672 = vcmp.le.f32.partialorder %v501, %v596
  %vm673 = vcmp.le.f32.partialorder %v503, %v617
  %vm674 = vcmp.le.f32.partialorder %v346, %v554
  %vm675 = vcmp.le.f32.partialorder %v348, %v575
  %vm676 = vcmp.le.f32.partialorder %v507, %v596
  %vm677 = vcmp.le.f32.partialorder %v509, %v617
  %vm678 = vcmp.le.f32.partialorder %v352, %v554
  %vm679 = vcmp.le.f32.partialorder %v354, %v575
  %vm680 = vcmp.le.f32.partialorder %v513, %v596
  %vm681 = vcmp.le.f32.partialorder %v515, %v617
  %v682 = vsel %vm618, %v518, 2147483647
  %v683 = vsel %vm619, %v518, 2147483647
  %v684 = vsel %vm620, %v518, 2147483647
  %v685 = vsel %vm621, %v518, 2147483647
  %v686 = vsel %vm622, %v519, 2147483647
  %v687 = vsel %vm623, %v519, 2147483647
  %v688 = vsel %vm624, %v519, 2147483647
  %v689 = vsel %vm625, %v519, 2147483647
  %v690 = vsel %vm626, %v520, 2147483647
  %v691 = vsel %vm627, %v520, 2147483647
  %v692 = vsel %vm628, %v520, 2147483647
  %v693 = vsel %vm629, %v520, 2147483647
  %v694 = vsel %vm630, %v521, 2147483647
  %v695 = vsel %vm631, %v521, 2147483647
  %v696 = vsel %vm632, %v521, 2147483647
  %v697 = vsel %vm633, %v521, 2147483647
  %v698 = vsel %vm634, %v522, 2147483647
  %v699 = vsel %vm635, %v522, 2147483647
  %v700 = vsel %vm636, %v522, 2147483647
  %v701 = vsel %vm637, %v522, 2147483647
  %v702 = vsel %vm638, %v523, 2147483647
  %v703 = vsel %vm639, %v523, 2147483647
  %v704 = vsel %vm640, %v523, 2147483647
  %v705 = vsel %vm641, %v523, 2147483647
  %v706 = vsel %vm642, %v524, 2147483647
  %v707 = vsel %vm643, %v524, 2147483647
  %v708 = vsel %vm644, %v524, 2147483647
  %v709 = vsel %vm645, %v524, 2147483647
  %v710 = vsel %vm646, %v525, 2147483647
  %v711 = vsel %vm647, %v525, 2147483647
  %v712 = vsel %vm648, %v525, 2147483647
  %v713 = vsel %vm649, %v525, 2147483647
  %v714 = vsel %vm650, %v526, 2147483647
  %v715 = vsel %vm651, %v526, 2147483647
  %v716 = vsel %vm652, %v526, 2147483647
  %v717 = vsel %vm653, %v526, 2147483647
  %v718 = vsel %vm654, %v527, 2147483647
  %v719 = vsel %vm655, %v527, 2147483647
  %v720 = vsel %vm656, %v527, 2147483647
  %v721 = vsel %vm657, %v527, 2147483647
  %v722 = vsel %vm658, %v528, 2147483647
  %v723 = vsel %vm659, %v528, 2147483647
  %v724 = vsel %vm660, %v528, 2147483647
  %v725 = vsel %vm661, %v528, 2147483647
  %v726 = vsel %vm662, %v529, 2147483647
  %v727 = vsel %vm663, %v529, 2147483647
  %v728 = vsel %vm664, %v529, 2147483647
  %v729 = vsel %vm665, %v529, 2147483647
  %v730 = vsel %vm666, %v530, 2147483647
  %v731 = vsel %vm667, %v530, 2147483647
  %v732 = vsel %vm668, %v530, 2147483647
  %v733 = vsel %vm669, %v530, 2147483647
  %v734 = vsel %vm670, %v531, 2147483647
  %v735 = vsel %vm671, %v531, 2147483647
  %v736 = vsel %vm672, %v531, 2147483647
  %v737 = vsel %vm673, %v531, 2147483647
  %v738 = vsel %vm674, %v532, 2147483647
  %v739 = vsel %vm675, %v532, 2147483647
  %v740 = vsel %vm676, %v532, 2147483647
  %v741 = vsel %vm677, %v532, 2147483647
  %v742 = vsel %vm678, %v533, 2147483647
  %v743 = vsel %vm679, %v533, 2147483647
  %v744 = vsel %vm680, %v533, 2147483647
  %v745 = vsel %vm681, %v533, 2147483647
  %vm746 = vcmp.lt.s32.totalorder %v682, %v686
  %v747 = vsel %vm746, %v682, %v686
  %vm748 = vcmp.lt.s32.totalorder %v747, %v690
  %v749 = vsel %vm748, %v747, %v690
  %vm750 = vcmp.lt.s32.totalorder %v749, %v694
  %v751 = vsel %vm750, %v749, %v694
  %vm752 = vcmp.lt.s32.totalorder %v751, %v698
  %v753 = vsel %vm752, %v751, %v698
  %vm754 = vcmp.lt.s32.totalorder %v753, %v702
  %v755 = vsel %vm754, %v753, %v702
  %vm756 = vcmp.lt.s32.totalorder %v755, %v706
  %v757 = vsel %vm756, %v755, %v706
  %vm758 = vcmp.lt.s32.totalorder %v757, %v710
  %v759 = vsel %vm758, %v757, %v710
  %vm760 = vcmp.lt.s32.totalorder %v759, %v714
  %v761 = vsel %vm760, %v759, %v714
  %vm762 = vcmp.lt.s32.totalorder %v761, %v718
  %v763 = vsel %vm762, %v761, %v718
  %vm764 = vcmp.lt.s32.totalorder %v763, %v722
  %v765 = vsel %vm764, %v763, %v722
  %vm766 = vcmp.lt.s32.totalorder %v765, %v726
  %v767 = vsel %vm766, %v765, %v726
  %vm768 = vcmp.lt.s32.totalorder %v767, %v730
  %v769 = vsel %vm768, %v767, %v730
  %vm770 = vcmp.lt.s32.totalorder %v769, %v734
  %v771 = vsel %vm770, %v769, %v734
  %vm772 = vcmp.lt.s32.totalorder %v771, %v738
  %v773 = vsel %vm772, %v771, %v738
  %vm774 = vcmp.lt.s32.totalorder %v773, %v742
  %v775 = vsel %vm774, %v773, %v742
  %v776 = vrot.slane %v775, 4
  %vm777 = vcmp.lt.s32.totalorder %v775, %v776
  %v778 = vsel %vm777, %v775, %v776
  %v779 = vrot.slane %v778, 2
  %vm780 = vcmp.lt.s32.totalorder %v778, %v779
  %v781 = vsel %vm780, %v778, %v779
  %v782 = vrot.slane %v781, 1
  %vm783 = vcmp.lt.s32.totalorder %v781, %v782
  %v784 = vsel %vm783, %v781, %v782
  %vm785 = vcmp.lt.s32.totalorder %v683, %v687
  %v786 = vsel %vm785, %v683, %v687
  %vm787 = vcmp.lt.s32.totalorder %v786, %v691
  %v788 = vsel %vm787, %v786, %v691
  %vm789 = vcmp.lt.s32.totalorder %v788, %v695
  %v790 = vsel %vm789, %v788, %v695
  %vm791 = vcmp.lt.s32.totalorder %v790, %v699
  %v792 = vsel %vm791, %v790, %v699
  %vm793 = vcmp.lt.s32.totalorder %v792, %v703
  %v794 = vsel %vm793, %v792, %v703
  %vm795 = vcmp.lt.s32.totalorder %v794, %v707
  %v796 = vsel %vm795, %v794, %v707
  %vm797 = vcmp.lt.s32.totalorder %v796, %v711
  %v798 = vsel %vm797, %v796, %v711
  %vm799 = vcmp.lt.s32.totalorder %v798, %v715
  %v800 = vsel %vm799, %v798, %v715
  %vm801 = vcmp.lt.s32.totalorder %v800, %v719
  %v802 = vsel %vm801, %v800, %v719
  %vm803 = vcmp.lt.s32.totalorder %v802, %v723
  %v804 = vsel %vm803, %v802, %v723
  %vm805 = vcmp.lt.s32.totalorder %v804, %v727
  %v806 = vsel %vm805, %v804, %v727
  %vm807 = vcmp.lt.s32.totalorder %v806, %v731
  %v808 = vsel %vm807, %v806, %v731
  %vm809 = vcmp.lt.s32.totalorder %v808, %v735
  %v810 = vsel %vm809, %v808, %v735
  %vm811 = vcmp.lt.s32.totalorder %v810, %v739
  %v812 = vsel %vm811, %v810, %v739
  %vm813 = vcmp.lt.s32.totalorder %v812, %v743
  %v814 = vsel %vm813, %v812, %v743
  %v815 = vrot.slane %v814, 4
  %vm816 = vcmp.lt.s32.totalorder %v814, %v815
  %v817 = vsel %vm816, %v814, %v815
  %v818 = vrot.slane %v817, 2
  %vm819 = vcmp.lt.s32.totalorder %v817, %v818
  %v820 = vsel %vm819, %v817, %v818
  %v821 = vrot.slane %v820, 1
  %vm822 = vcmp.lt.s32.totalorder %v820, %v821
  %v823 = vsel %vm822, %v820, %v821
  %vm824 = vcmp.lt.s32.totalorder %v684, %v688
  %v825 = vsel %vm824, %v684, %v688
  %vm826 = vcmp.lt.s32.totalorder %v825, %v692
  %v827 = vsel %vm826, %v825, %v692
  %vm828 = vcmp.lt.s32.totalorder %v827, %v696
  %v829 = vsel %vm828, %v827, %v696
  %vm830 = vcmp.lt.s32.totalorder %v829, %v700
  %v831 = vsel %vm830, %v829, %v700
  %vm832 = vcmp.lt.s32.totalorder %v831, %v704
  %v833 = vsel %vm832, %v831, %v704
  %vm834 = vcmp.lt.s32.totalorder %v833, %v708
  %v835 = vsel %vm834, %v833, %v708
  %vm836 = vcmp.lt.s32.totalorder %v835, %v712
  %v837 = vsel %vm836, %v835, %v712
  %vm838 = vcmp.lt.s32.totalorder %v837, %v716
  %v839 = vsel %vm838, %v837, %v716
  %vm840 = vcmp.lt.s32.totalorder %v839, %v720
  %v841 = vsel %vm840, %v839, %v720
  %vm842 = vcmp.lt.s32.totalorder %v841, %v724
  %v843 = vsel %vm842, %v841, %v724
  %vm844 = vcmp.lt.s32.totalorder %v843, %v728
  %v845 = vsel %vm844, %v843, %v728
  %vm846 = vcmp.lt.s32.totalorder %v845, %v732
  %v847 = vsel %vm846, %v845, %v732
  %vm848 = vcmp.lt.s32.totalorder %v847, %v736
  %v849 = vsel %vm848, %v847, %v736
  %vm850 = vcmp.lt.s32.totalorder %v849, %v740
  %v851 = vsel %vm850, %v849, %v740
  %vm852 = vcmp.lt.s32.totalorder %v851, %v744
  %v853 = vsel %vm852, %v851, %v744
  %v854 = vrot.slane %v853, 4
  %vm855 = vcmp.lt.s32.totalorder %v853, %v854
  %v856 = vsel %vm855, %v853, %v854
  %v857 = vrot.slane %v856, 2
  %vm858 = vcmp.lt.s32.totalorder %v856, %v857
  %v859 = vsel %vm858, %v856, %v857
  %v860 = vrot.slane %v859, 1
  %vm861 = vcmp.lt.s32.totalorder %v859, %v860
  %v862 = vsel %vm861, %v859, %v860
  %vm863 = vcmp.lt.s32.totalorder %v685, %v689
  %v864 = vsel %vm863, %v685, %v689
  %vm865 = vcmp.lt.s32.totalorder %v864, %v693
  %v866 = vsel %vm865, %v864, %v693
  %vm867 = vcmp.lt.s32.totalorder %v866, %v697
  %v868 = vsel %vm867, %v866, %v697
  %vm869 = vcmp.lt.s32.totalorder %v868, %v701
  %v870 = vsel %vm869, %v868, %v701
  %vm871 = vcmp.lt.s32.totalorder %v870, %v705
  %v872 = vsel %vm871, %v870, %v705
  %vm873 = vcmp.lt.s32.totalorder %v872, %v709
  %v874 = vsel %vm873, %v872, %v709
  %vm875 = vcmp.lt.s32.totalorder %v874, %v713
  %v876 = vsel %vm875, %v874, %v713
  %vm877 = vcmp.lt.s32.totalorder %v876, %v717
  %v878 = vsel %vm877, %v876, %v717
  %vm879 = vcmp.lt.s32.totalorder %v878, %v721
  %v880 = vsel %vm879, %v878, %v721
  %vm881 = vcmp.lt.s32.totalorder %v880, %v725
  %v882 = vsel %vm881, %v880, %v725
  %vm883 = vcmp.lt.s32.totalorder %v882, %v729
  %v884 = vsel %vm883, %v882, %v729
  %vm885 = vcmp.lt.s32.totalorder %v884, %v733
  %v886 = vsel %vm885, %v884, %v733
  %vm887 = vcmp.lt.s32.totalorder %v886, %v737
  %v888 = vsel %vm887, %v886, %v737
  %vm889 = vcmp.lt.s32.totalorder %v888, %v741
  %v890 = vsel %vm889, %v888, %v741
  %vm891 = vcmp.lt.s32.totalorder %v890, %v745
  %v892 = vsel %vm891, %v890, %v745
  %v893 = vrot.slane %v892, 4
  %vm894 = vcmp.lt.s32.totalorder %v892, %v893
  %v895 = vsel %vm894, %v892, %v893
  %v896 = vrot.slane %v895, 2
  %vm897 = vcmp.lt.s32.totalorder %v895, %v896
  %v898 = vsel %vm897, %v895, %v896
  %v899 = vrot.slane %v898, 1
  %vm900 = vcmp.lt.s32.totalorder %v898, %v899
  %v901 = vsel %vm900, %v898, %v899
  %vm902 = vcmp.eq.s32.totalorder %v518, %v784
  %vm903 = vcmp.eq.s32.totalorder %v518, %v823
  %vm904 = vcmp.eq.s32.totalorder %v518, %v862
  %vm905 = vcmp.eq.s32.totalorder %v518, %v901
  %vm906 = vcmp.eq.s32.totalorder %v519, %v784
  %vm907 = vcmp.eq.s32.totalorder %v519, %v823
  %vm908 = vcmp.eq.s32.totalorder %v519, %v862
  %vm909 = vcmp.eq.s32.totalorder %v519, %v901
  %vm910 = vcmp.eq.s32.totalorder %v520, %v784
  %vm911 = vcmp.eq.s32.totalorder %v520, %v823
  %vm912 = vcmp.eq.s32.totalorder %v520, %v862
  %vm913 = vcmp.eq.s32.totalorder %v520, %v901
  %vm914 = vcmp.eq.s32.totalorder %v521, %v784
  %vm915 = vcmp.eq.s32.totalorder %v521, %v823
  %vm916 = vcmp.eq.s32.totalorder %v521, %v862
  %vm917 = vcmp.eq.s32.totalorder %v521, %v901
  %vm918 = vcmp.eq.s32.totalorder %v522, %v784
  %vm919 = vcmp.eq.s32.totalorder %v522, %v823
  %vm920 = vcmp.eq.s32.totalorder %v522, %v862
  %vm921 = vcmp.eq.s32.totalorder %v522, %v901
  %vm922 = vcmp.eq.s32.totalorder %v523, %v784
  %vm923 = vcmp.eq.s32.totalorder %v523, %v823
  %vm924 = vcmp.eq.s32.totalorder %v523, %v862
  %vm925 = vcmp.eq.s32.totalorder %v523, %v901
  %vm926 = vcmp.eq.s32.totalorder %v524, %v784
  %vm927 = vcmp.eq.s32.totalorder %v524, %v823
  %vm928 = vcmp.eq.s32.totalorder %v524, %v862
  %vm929 = vcmp.eq.s32.totalorder %v524, %v901
  %vm930 = vcmp.eq.s32.totalorder %v525, %v784
  %vm931 = vcmp.eq.s32.totalorder %v525, %v823
  %vm932 = vcmp.eq.s32.totalorder %v525, %v862
  %vm933 = vcmp.eq.s32.totalorder %v525, %v901
  %vm934 = vcmp.eq.s32.totalorder %v526, %v784
  %vm935 = vcmp.eq.s32.totalorder %v526, %v823
  %vm936 = vcmp.eq.s32.totalorder %v526, %v862
  %vm937 = vcmp.eq.s32.totalorder %v526, %v901
  %vm938 = vcmp.eq.s32.totalorder %v527, %v784
  %vm939 = vcmp.eq.s32.totalorder %v527, %v823
  %vm940 = vcmp.eq.s32.totalorder %v527, %v862
  %vm941 = vcmp.eq.s32.totalorder %v527, %v901
  %vm942 = vcmp.eq.s32.totalorder %v528, %v784
  %vm943 = vcmp.eq.s32.totalorder %v528, %v823
  %vm944 = vcmp.eq.s32.totalorder %v528, %v862
  %vm945 = vcmp.eq.s32.totalorder %v528, %v901
  %vm946 = vcmp.eq.s32.totalorder %v529, %v784
  %vm947 = vcmp.eq.s32.totalorder %v529, %v823
  %vm948 = vcmp.eq.s32.totalorder %v529, %v862
  %vm949 = vcmp.eq.s32.totalorder %v529, %v901
  %vm950 = vcmp.eq.s32.totalorder %v530, %v784
  %vm951 = vcmp.eq.s32.totalorder %v530, %v823
  %vm952 = vcmp.eq.s32.totalorder %v530, %v862
  %vm953 = vcmp.eq.s32.totalorder %v530, %v901
  %vm954 = vcmp.eq.s32.totalorder %v531, %v784
  %vm955 = vcmp.eq.s32.totalorder %v531, %v823
  %vm956 = vcmp.eq.s32.totalorder %v531, %v862
  %vm957 = vcmp.eq.s32.totalorder %v531, %v901
  %vm958 = vcmp.eq.s32.totalorder %v532, %v784
  %vm959 = vcmp.eq.s32.totalorder %v532, %v823
  %vm960 = vcmp.eq.s32.totalorder %v532, %v862
  %vm961 = vcmp.eq.s32.totalorder %v532, %v901
  %vm962 = vcmp.eq.s32.totalorder %v533, %v784
  %vm963 = vcmp.eq.s32.totalorder %v533, %v823
  %vm964 = vcmp.eq.s32.totalorder %v533, %v862
  %vm965 = vcmp.eq.s32.totalorder %v533, %v901
  %v966 = vsel %vm902, 1, 0
  %v967 = vsel %vm903, 1, 0
  %v968 = vsel %vm904, 1, 0
  %v969 = vsel %vm905, 1, 0
  %v970 = vsel %vm906, 1, 0
  %v971 = vsel %vm907, 1, 0
  %v972 = vsel %vm908, 1, 0
  %v973 = vsel %vm909, 1, 0
  %v974 = vsel %vm910, 1, 0
  %v975 = vsel %vm911, 1, 0
  %v976 = vsel %vm912, 1, 0
  %v977 = vsel %vm913, 1, 0
  %v978 = vsel %vm914, 1, 0
  %v979 = vsel %vm915, 1, 0
  %v980 = vsel %vm916, 1, 0
  %v981 = vsel %vm917, 1, 0
  %v982 = vsel %vm918, 1, 0
  %v983 = vsel %vm919, 1, 0
  %v984 = vsel %vm920, 1, 0
  %v985 = vsel %vm921, 1, 0
  %v986 = vsel %vm922, 1, 0
  %v987 = vsel %vm923, 1, 0
  %v988 = vsel %vm924, 1, 0
  %v989 = vsel %vm925, 1, 0
  %v990 = vsel %vm926, 1, 0
  %v991 = vsel %vm927, 1, 0
  %v992 = vsel %vm928, 1, 0
  %v993 = vsel %vm929, 1, 0
  %v994 = vsel %vm930, 1, 0
  %v995 = vsel %vm931, 1, 0
  %v996 = vsel %vm932, 1, 0
  %v997 = vsel %vm933, 1, 0
  %v998 = vsel %vm934, 1, 0
  %v999 = vsel %vm935, 1, 0
  %v1000 = vsel %vm936, 1, 0
  %v1001 = vsel %vm937, 1, 0
  %v1002 = vsel %vm938, 1, 0
  %v1003 = vsel %vm939, 1, 0
  %v1004 = vsel %vm940, 1, 0
  %v1005 = vsel %vm941, 1, 0
  %v1006 = vsel %vm942, 1, 0
  %v1007 = vsel %vm943, 1, 0
  %v1008 = vsel %vm944, 1, 0
  %v1009 = vsel %vm945, 1, 0
  %v1010 = vsel %vm946, 1, 0
  %v1011 = vsel %vm947, 1, 0
  %v1012 = vsel %vm948, 1, 0
  %v1013 = vsel %vm949, 1, 0
  %v1014 = vsel %vm950, 1, 0
  %v1015 = vsel %vm951, 1, 0
  %v1016 = vsel %vm952, 1, 0
  %v1017 = vsel %vm953, 1, 0
  %v1018 = vsel %vm954, 1, 0
  %v1019 = vsel %vm955, 1, 0
  %v1020 = vsel %vm956, 1, 0
  %v1021 = vsel %vm957, 1, 0
  %v1022 = vsel %vm958, 1, 0
  %v1023 = vsel %vm959, 1, 0
  %v1024 = vsel %vm960, 1, 0
  %v1025 = vsel %vm961, 1, 0
  %v1026 = vsel %vm962, 1, 0
  %v1027 = vsel %vm963, 1, 0
  %v1028 = vsel %vm964, 1, 0
  %v1029 = vsel %vm965, 1, 0
  %v1030 = vcvt.s32.f32 %v966
  %v1031 = vcvt.s32.f32 %v967
  %v1032 = vcvt.s32.f32 %v968
  %v1033 = vcvt.s32.f32 %v969
  %v1034 = vcvt.s32.f32 %v970
  %v1035 = vcvt.s32.f32 %v971
  %v1036 = vcvt.s32.f32 %v972
  %v1037 = vcvt.s32.f32 %v973
  %v1038 = vcvt.s32.f32 %v974
  %v1039 = vcvt.s32.f32 %v975
  %v1040 = vcvt.s32.f32 %v976
  %v1041 = vcvt.s32.f32 %v977
  %v1042 = vcvt.s32.f32 %v978
  %v1043 = vcvt.s32.f32 %v979
  %v1044 = vcvt.s32.f32 %v980
  %v1045 = vcvt.s32.f32 %v981
  %v1046 = vcvt.s32.f32 %v982
  %v1047 = vcvt.s32.f32 %v983
  %v1048 = vcvt.s32.f32 %v984
  %v1049 = vcvt.s32.f32 %v985
  %v1050 = vcvt.s32.f32 %v986
  %v1051 = vcvt.s32.f32 %v987
  %v1052 = vcvt.s32.f32 %v988
  %v1053 = vcvt.s32.f32 %v989
  %v1054 = vcvt.s32.f32 %v990
  %v1055 = vcvt.s32.f32 %v991
  %v1056 = vcvt.s32.f32 %v992
  %v1057 = vcvt.s32.f32 %v993
  %v1058 = vcvt.s32.f32 %v994
  %v1059 = vcvt.s32.f32 %v995
  %v1060 = vcvt.s32.f32 %v996
  %v1061 = vcvt.s32.f32 %v997
  %v1062 = vcvt.s32.f32 %v998
  %v1063 = vcvt.s32.f32 %v999
  %v1064 = vcvt.s32.f32 %v1000
  %v1065 = vcvt.s32.f32 %v1001
  %v1066 = vcvt.s32.f32 %v1002
  %v1067 = vcvt.s32.f32 %v1003
  %v1068 = vcvt.s32.f32 %v1004
  %v1069 = vcvt.s32.f32 %v1005
  %v1070 = vcvt.s32.f32 %v1006
  %v1071 = vcvt.s32.f32 %v1007
  %v1072 = vcvt.s32.f32 %v1008
  %v1073 = vcvt.s32.f32 %v1009
  %v1074 = vcvt.s32.f32 %v1010
  %v1075 = vcvt.s32.f32 %v1011
  %v1076 = vcvt.s32.f32 %v1012
  %v1077 = vcvt.s32.f32 %v1013
  %v1078 = vcvt.s32.f32 %v1014
  %v1079 = vcvt.s32.f32 %v1015
  %v1080 = vcvt.s32.f32 %v1016
  %v1081 = vcvt.s32.f32 %v1017
  %v1082 = vcvt.s32.f32 %v1018
  %v1083 = vcvt.s32.f32 %v1019
  %v1084 = vcvt.s32.f32 %v1020
  %v1085 = vcvt.s32.f32 %v1021
  %v1086 = vcvt.s32.f32 %v1022
  %v1087 = vcvt.s32.f32 %v1023
  %v1088 = vcvt.s32.f32 %v1024
  %v1089 = vcvt.s32.f32 %v1025
  %v1090 = vcvt.s32.f32 %v1026
  %v1091 = vcvt.s32.f32 %v1027
  %v1092 = vcvt.s32.f32 %v1028
  %v1093 = vcvt.s32.f32 %v1029
  %v1094 = vld [vmem:[%s3] sm:$0xf]
  %1095 = vmatprep.subr.mxu0 %v1031
  %1096 = vmatpush1.msra.mxu0 %v1030
  %1097 = vmatprep.subr.mxu0 %v1035
  %1098 = vmatpush1.msra.mxu0 %v1034
  %1099 = vmatprep.subr.mxu0 %v1039
  %1100 = vmatpush1.msra.mxu0 %v1038
  %1101 = vmatprep.subr.mxu0 %v1043
  %1102 = vmatpush1.msra.mxu0 %v1042
  %1103 = vmatprep.subr.mxu0 %v1047
  %1104 = vmatpush1.msra.mxu0 %v1046
  %1105 = vmatprep.subr.mxu0 %v1051
  %1106 = vmatpush1.msra.mxu0 %v1050
  %1107 = vmatprep.subr.mxu0 %v1055
  %1108 = vmatpush1.msra.mxu0 %v1054
  %1109 = vmatprep.subr.mxu0 %v1059
  %1110 = vmatpush1.msra.mxu0 %v1058
  %1111 = vmatprep.subr.mxu0 %v1063
  %1112 = vmatpush1.msra.mxu0 %v1062
  %1113 = vmatprep.subr.mxu0 %v1067
  %1114 = vmatpush1.msra.mxu0 %v1066
  %1115 = vmatprep.subr.mxu0 %v1071
  %1116 = vmatpush1.msra.mxu0 %v1070
  %1117 = vmatprep.subr.mxu0 %v1075
  %1118 = vmatpush1.msra.mxu0 %v1074
  %1119 = vmatprep.subr.mxu0 %v1079
  %1120 = vmatpush1.msra.mxu0 %v1078
  %1121 = vmatprep.subr.mxu0 %v1083
  %1122 = vmatpush1.msra.mxu0 %v1082
  %1123 = vmatprep.subr.mxu0 %v1087
  %1124 = vmatpush1.msra.mxu0 %v1086
  %1125 = vmatprep.subr.mxu0 %v1091
  %1126 = vmatpush1.msra.mxu0 %v1090
  %1127 = vmatprep.subr.mxu0 0.0
  %1128 = vmatpush1.msra.mxu0 0.0
  %1129 = vmatprep.subr.mxu0 0.0
  %1130 = vmatpush1.msra.mxu0 0.0
  %1131 = vmatprep.subr.mxu0 0.0
  %1132 = vmatpush1.msra.mxu0 0.0
  %1133 = vmatprep.subr.mxu0 0.0
  %1134 = vmatpush1.msra.mxu0 0.0
  %1135 = vmatprep.subr.mxu0 0.0
  %1136 = vmatpush1.msra.mxu0 0.0
  %1137 = vmatprep.subr.mxu0 0.0
  %1138 = vmatpush1.msra.mxu0 0.0
  %1139 = vmatprep.subr.mxu0 0.0
  %1140 = vmatpush1.msra.mxu0 0.0
  %1141 = vmatprep.subr.mxu0 0.0
  %1142 = vmatpush1.msra.mxu0 0.0
  %1143 = vmatprep.subr.mxu0 0.0
  %1144 = vmatpush1.msra.mxu0 0.0
  %1145 = vmatprep.subr.mxu0 0.0
  %1146 = vmatpush1.msra.mxu0 0.0
  %1147 = vmatprep.subr.mxu0 0.0
  %1148 = vmatpush1.msra.mxu0 0.0
  %1149 = vmatprep.subr.mxu0 0.0
  %1150 = vmatpush1.msra.mxu0 0.0
  %1151 = vmatprep.subr.mxu0 0.0
  %1152 = vmatpush1.msra.mxu0 0.0
  %1153 = vmatprep.subr.mxu0 0.0
  %1154 = vmatpush1.msra.mxu0 0.0
  %1155 = vmatprep.subr.mxu0 0.0
  %1156 = vmatpush1.msra.mxu0 0.0
  %1157 = vmatprep.subr.mxu0 0.0
  %1158 = vmatpush1.msra.mxu0 0.0
  %1159 = vmatprep.mubr.f32.mxu0 0.0
  %1160 = vmatmul.mubr.f32.gmra.mrb[0].mxu0 %v1094
  %v1161 = vpop.f32.mrb[0].mxu0
  %v1162 = vadd.f32 0.0, %v1161
  %v1163 = vpop.f32.mrb[0].mxu0
  %v1164 = vadd.f32 0.0, %v1163
  %1165 = vdwg.mxu0
  %1166 = vmatprep.subr.mxu0 %v1033
  %1167 = vmatpush1.msra.mxu0 %v1032
  %1168 = vmatprep.subr.mxu0 %v1037
  %1169 = vmatpush1.msra.mxu0 %v1036
  %1170 = vmatprep.subr.mxu0 %v1041
  %1171 = vmatpush1.msra.mxu0 %v1040
  %1172 = vmatprep.subr.mxu0 %v1045
  %1173 = vmatpush1.msra.mxu0 %v1044
  %1174 = vmatprep.subr.mxu0 %v1049
  %1175 = vmatpush1.msra.mxu0 %v1048
  %1176 = vmatprep.subr.mxu0 %v1053
  %1177 = vmatpush1.msra.mxu0 %v1052
  %1178 = vmatprep.subr.mxu0 %v1057
  %1179 = vmatpush1.msra.mxu0 %v1056
  %1180 = vmatprep.subr.mxu0 %v1061
  %1181 = vmatpush1.msra.mxu0 %v1060
  %1182 = vmatprep.subr.mxu0 %v1065
  %1183 = vmatpush1.msra.mxu0 %v1064
  %1184 = vmatprep.subr.mxu0 %v1069
  %1185 = vmatpush1.msra.mxu0 %v1068
  %1186 = vmatprep.subr.mxu0 %v1073
  %1187 = vmatpush1.msra.mxu0 %v1072
  %1188 = vmatprep.subr.mxu0 %v1077
  %1189 = vmatpush1.msra.mxu0 %v1076
  %1190 = vmatprep.subr.mxu0 %v1081
  %1191 = vmatpush1.msra.mxu0 %v1080
  %1192 = vmatprep.subr.mxu0 %v1085
  %1193 = vmatpush1.msra.mxu0 %v1084
  %1194 = vmatprep.subr.mxu0 %v1089
  %1195 = vmatpush1.msra.mxu0 %v1088
  %1196 = vmatprep.subr.mxu0 %v1093
  %1197 = vmatpush1.msra.mxu0 %v1092
  %1198 = vmatprep.subr.mxu0 0.0
  %1199 = vmatpush1.msra.mxu0 0.0
  %1200 = vmatprep.subr.mxu0 0.0
  %1201 = vmatpush1.msra.mxu0 0.0
  %1202 = vmatprep.subr.mxu0 0.0
  %1203 = vmatpush1.msra.mxu0 0.0
  %1204 = vmatprep.subr.mxu0 0.0
  %1205 = vmatpush1.msra.mxu0 0.0
  %1206 = vmatprep.subr.mxu0 0.0
  %1207 = vmatpush1.msra.mxu0 0.0
  %1208 = vmatprep.subr.mxu0 0.0
  %1209 = vmatpush1.msra.mxu0 0.0
  %1210 = vmatprep.subr.mxu0 0.0
  %1211 = vmatpush1.msra.mxu0 0.0
  %1212 = vmatprep.subr.mxu0 0.0
  %1213 = vmatpush1.msra.mxu0 0.0
  %1214 = vmatprep.subr.mxu0 0.0
  %1215 = vmatpush1.msra.mxu0 0.0
  %1216 = vmatprep.subr.mxu0 0.0
  %1217 = vmatpush1.msra.mxu0 0.0
  %1218 = vmatprep.subr.mxu0 0.0
  %1219 = vmatpush1.msra.mxu0 0.0
  %1220 = vmatprep.subr.mxu0 0.0
  %1221 = vmatpush1.msra.mxu0 0.0
  %1222 = vmatprep.subr.mxu0 0.0
  %1223 = vmatpush1.msra.mxu0 0.0
  %1224 = vmatprep.subr.mxu0 0.0
  %1225 = vmatpush1.msra.mxu0 0.0
  %1226 = vmatprep.subr.mxu0 0.0
  %1227 = vmatpush1.msra.mxu0 0.0
  %1228 = vmatprep.subr.mxu0 0.0
  %1229 = vmatpush1.msra.mxu0 0.0
  %1230 = vmatprep.mubr.f32.mxu0 0.0
  %1231 = vmatmul.mubr.f32.gmra.mrb[0].mxu0 %v1094
  %v1232 = vpop.f32.mrb[0].mxu0
  %v1233 = vadd.f32 0.0, %v1232
  %v1234 = vpop.f32.mrb[0].mxu0
  %v1235 = vadd.f32 0.0, %v1234
  %1236 = vdwg.mxu0
  %v1241 = vcombine.low %v1162, %v1164
  %v1242 = vcombine.low %v1233, %v1235
  %1245 = vst [vmem:[%s4] sm:$0xff] %v1241
  %1246 = vst [vmem:[%s4 + $0x8] sm:$0xff] %v1242
  %1247 = vmatprep.subr.mxu0 %v1031
  %1248 = vmatpush1.xpose.msra.mxu0 %v1030
  %1249 = vmatprep.subr.mxu0 %v1035
  %1250 = vmatpush1.xpose.msra.mxu0 %v1034
  %1251 = vmatprep.subr.mxu0 %v1039
  %1252 = vmatpush1.xpose.msra.mxu0 %v1038
  %1253 = vmatprep.subr.mxu0 %v1043
  %1254 = vmatpush1.xpose.msra.mxu0 %v1042
  %1255 = vmatprep.subr.mxu0 %v1047
  %1256 = vmatpush1.xpose.msra.mxu0 %v1046
  %1257 = vmatprep.subr.mxu0 %v1051
  %1258 = vmatpush1.xpose.msra.mxu0 %v1050
  %1259 = vmatprep.subr.mxu0 %v1055
  %1260 = vmatpush1.xpose.msra.mxu0 %v1054
  %1261 = vmatprep.subr.mxu0 %v1059
  %1262 = vmatpush1.xpose.msra.mxu0 %v1058
  %1263 = vmatprep.subr.mxu0 %v1063
  %1264 = vmatpush1.xpose.msra.mxu0 %v1062
  %1265 = vmatprep.subr.mxu0 %v1067
  %1266 = vmatpush1.xpose.msra.mxu0 %v1066
  %1267 = vmatprep.subr.mxu0 %v1071
  %1268 = vmatpush1.xpose.msra.mxu0 %v1070
  %1269 = vmatprep.subr.mxu0 %v1075
  %1270 = vmatpush1.xpose.msra.mxu0 %v1074
  %1271 = vmatprep.subr.mxu0 %v1079
  %1272 = vmatpush1.xpose.msra.mxu0 %v1078
  %1273 = vmatprep.subr.mxu0 %v1083
  %1274 = vmatpush1.xpose.msra.mxu0 %v1082
  %1275 = vmatprep.subr.mxu0 %v1087
  %1276 = vmatpush1.xpose.msra.mxu0 %v1086
  %1277 = vmatprep.subr.mxu0 %v1091
  %1278 = vmatpush1.xpose.msra.mxu0 %v1090
  %1279 = vmatprep.subr.mxu0 0.0
  %1280 = vmatpush1.xpose.msra.mxu0 0.0
  %1281 = vmatprep.subr.mxu0 0.0
  %1282 = vmatpush1.xpose.msra.mxu0 0.0
  %1283 = vmatprep.subr.mxu0 0.0
  %1284 = vmatpush1.xpose.msra.mxu0 0.0
  %1285 = vmatprep.subr.mxu0 0.0
  %1286 = vmatpush1.xpose.msra.mxu0 0.0
  %1287 = vmatprep.subr.mxu0 0.0
  %1288 = vmatpush1.xpose.msra.mxu0 0.0
  %1289 = vmatprep.subr.mxu0 0.0
  %1290 = vmatpush1.xpose.msra.mxu0 0.0
  %1291 = vmatprep.subr.mxu0 0.0
  %1292 = vmatpush1.xpose.msra.mxu0 0.0
  %1293 = vmatprep.subr.mxu0 0.0
  %1294 = vmatpush1.xpose.msra.mxu0 0.0
  %1295 = vmatprep.subr.mxu0 0.0
  %1296 = vmatpush1.xpose.msra.mxu0 0.0
  %1297 = vmatprep.subr.mxu0 0.0
  %1298 = vmatpush1.xpose.msra.mxu0 0.0
  %1299 = vmatprep.subr.mxu0 0.0
  %1300 = vmatpush1.xpose.msra.mxu0 0.0
  %1301 = vmatprep.subr.mxu0 0.0
  %1302 = vmatpush1.xpose.msra.mxu0 0.0
  %1303 = vmatprep.subr.mxu0 0.0
  %1304 = vmatpush1.xpose.msra.mxu0 0.0
  %1305 = vmatprep.subr.mxu0 0.0
  %1306 = vmatpush1.xpose.msra.mxu0 0.0
  %1307 = vmatprep.subr.mxu0 0.0
  %1308 = vmatpush1.xpose.msra.mxu0 0.0
  %1309 = vmatprep.subr.mxu0 0.0
  %1310 = vmatpush1.xpose.msra.mxu0 0.0
  %1311 = vmatprep.mubr.f32.mxu0 1.0
  %1312 = vmatmul.mubr.f32.gmra.mrb[0].mxu0 1.0
  %v1313 = vpop.f32.mrb[0].mxu0
  %v1314 = vadd.f32 0.0, %v1313
  %v1315 = vpop.f32.mrb[0].mxu0
  %1316 = vdwg.mxu0
  %1317 = vmatprep.subr.mxu0 %v1033
  %1318 = vmatpush1.xpose.msra.mxu0 %v1032
  %1319 = vmatprep.subr.mxu0 %v1037
  %1320 = vmatpush1.xpose.msra.mxu0 %v1036
  %1321 = vmatprep.subr.mxu0 %v1041
  %1322 = vmatpush1.xpose.msra.mxu0 %v1040
  %1323 = vmatprep.subr.mxu0 %v1045
  %1324 = vmatpush1.xpose.msra.mxu0 %v1044
  %1325 = vmatprep.subr.mxu0 %v1049
  %1326 = vmatpush1.xpose.msra.mxu0 %v1048
  %1327 = vmatprep.subr.mxu0 %v1053
  %1328 = vmatpush1.xpose.msra.mxu0 %v1052
  %1329 = vmatprep.subr.mxu0 %v1057
  %1330 = vmatpush1.xpose.msra.mxu0 %v1056
  %1331 = vmatprep.subr.mxu0 %v1061
  %1332 = vmatpush1.xpose.msra.mxu0 %v1060
  %1333 = vmatprep.subr.mxu0 %v1065
  %1334 = vmatpush1.xpose.msra.mxu0 %v1064
  %1335 = vmatprep.subr.mxu0 %v1069
  %1336 = vmatpush1.xpose.msra.mxu0 %v1068
  %1337 = vmatprep.subr.mxu0 %v1073
  %1338 = vmatpush1.xpose.msra.mxu0 %v1072
  %1339 = vmatprep.subr.mxu0 %v1077
  %1340 = vmatpush1.xpose.msra.mxu0 %v1076
  %1341 = vmatprep.subr.mxu0 %v1081
  %1342 = vmatpush1.xpose.msra.mxu0 %v1080
  %1343 = vmatprep.subr.mxu0 %v1085
  %1344 = vmatpush1.xpose.msra.mxu0 %v1084
  %1345 = vmatprep.subr.mxu0 %v1089
  %1346 = vmatpush1.xpose.msra.mxu0 %v1088
  %1347 = vmatprep.subr.mxu0 %v1093
  %1348 = vmatpush1.xpose.msra.mxu0 %v1092
  %1349 = vmatprep.subr.mxu0 0.0
  %1350 = vmatpush1.xpose.msra.mxu0 0.0
  %1351 = vmatprep.subr.mxu0 0.0
  %1352 = vmatpush1.xpose.msra.mxu0 0.0
  %1353 = vmatprep.subr.mxu0 0.0
  %1354 = vmatpush1.xpose.msra.mxu0 0.0
  %1355 = vmatprep.subr.mxu0 0.0
  %1356 = vmatpush1.xpose.msra.mxu0 0.0
  %1357 = vmatprep.subr.mxu0 0.0
  %1358 = vmatpush1.xpose.msra.mxu0 0.0
  %1359 = vmatprep.subr.mxu0 0.0
  %1360 = vmatpush1.xpose.msra.mxu0 0.0
  %1361 = vmatprep.subr.mxu0 0.0
  %1362 = vmatpush1.xpose.msra.mxu0 0.0
  %1363 = vmatprep.subr.mxu0 0.0
  %1364 = vmatpush1.xpose.msra.mxu0 0.0
  %1365 = vmatprep.subr.mxu0 0.0
  %1366 = vmatpush1.xpose.msra.mxu0 0.0
  %1367 = vmatprep.subr.mxu0 0.0
  %1368 = vmatpush1.xpose.msra.mxu0 0.0
  %1369 = vmatprep.subr.mxu0 0.0
  %1370 = vmatpush1.xpose.msra.mxu0 0.0
  %1371 = vmatprep.subr.mxu0 0.0
  %1372 = vmatpush1.xpose.msra.mxu0 0.0
  %1373 = vmatprep.subr.mxu0 0.0
  %1374 = vmatpush1.xpose.msra.mxu0 0.0
  %1375 = vmatprep.subr.mxu0 0.0
  %1376 = vmatpush1.xpose.msra.mxu0 0.0
  %1377 = vmatprep.subr.mxu0 0.0
  %1378 = vmatpush1.xpose.msra.mxu0 0.0
  %1379 = vmatprep.subr.mxu0 0.0
  %1380 = vmatpush1.xpose.msra.mxu0 0.0
  %1381 = vmatprep.mubr.f32.mxu0 1.0
  %1382 = vmatmul.mubr.f32.gmra.mrb[0].mxu0 1.0
  %v1383 = vpop.f32.mrb[0].mxu0
  %v1384 = vadd.f32 %v1314, %v1383
  %v1385 = vpop.f32.mrb[0].mxu0
  %1386 = vdwg.mxu0
  %1387 = vst [vmem:[%s5] sm:$0x1] %v1384
  // Predicated region
  $region18: #{_lambda_.1} parent=0 // pred_check
    _
  $region19: #{_lambda_.1} parent=0 // pred_check_branch
    %1389 = sbr.rel (0) target = $region21
  $region20: #{_lambda_.1} parent=0 // pred_region
    _
  $region21: #{_lambda_.1} parent=0 // pred_fallthru
    _
  // Predicated region
  $region22: #{_lambda_.1} parent=0 // pred_check
    _
  $region23: #{_lambda_.1} parent=0 // pred_check_branch
    %1391 = sbr.rel (0) target = $region25
  $region24: #{_lambda_.1} parent=0 // pred_region
    _
  $region25: #{_lambda_.1} parent=0 // pred_fallthru
    _
  // Predicated region
  $region26: #{_lambda_.1} parent=0 // pred_check
    _
  $region27: #{_lambda_.1} parent=0 // pred_check_branch
    %1393 = sbr.rel (0) target = $region29
  $region28: #{_lambda_.1} parent=0 // pred_region
    _
  $region29: #{_lambda_.1} parent=0 // pred_fallthru
    _
  // Predicated region
  $region30: #{_lambda_.1} parent=0 // pred_check
    _
  $region31: #{_lambda_.1} parent=0 // pred_check_branch
    %1395 = sbr.rel (0) target = $region33
  $region32: #{_lambda_.1} parent=0 // pred_region
    _
  $region33: #{_lambda_.1} parent=0 // pred_fallthru
    _

</llo_original>
